<compile_context>
chip_gen: v6e
topology: v6e:2x2x1
jax: 0.10.0
libtpu: 0.0.40
codegen_flags: <defaults>
</compile_context>

<pallas_src>
import jax
import jax.numpy as jnp
from jax.experimental import pallas as pl
from jax.experimental.pallas import tpu as pltpu


# ----------------------------------------------------------------------------
# Pallas kernels (lane-dense layout: (D, T, TB) with lanes = batch chunk)
# ----------------------------------------------------------------------------
def _move_preprocess_kernel(traj_ref, out_ref):
    """Subtract the last observed point from every step of the trajectory."""
    t = traj_ref.shape[1]
    # Load the reference row straight from the Ref (no full-tile materialize
    # followed by a value slice); jnp broadcasting expands it over T.
    ref_pt = traj_ref[:, t - 1:t, :]            # (D, 1, TB)
    out_ref[...] = traj_ref[...] - ref_pt       # (D, T, TB)


def _move_postprocess_kernel(pred_ref, ref_ref, out_ref):
    """Add the stored reference point back onto the (centered) predictions."""
    out_ref[...] = pred_ref[...] + ref_ref[...]  # (D,T,TB) + (D,1,TB)


# ----------------------------------------------------------------------------
# generation-aware tiling helpers
# ----------------------------------------------------------------------------
def _chip_tuning():
    """Returns (target_bytes_per_vmem_buffer, vmem_limit_bytes_or_None, multi_tc)."""
    try:
        kind = jax.devices()[0].device_kind.lower()
    except Exception:  # no devices / unusual backend: fall through to defaults
        kind = ""
    if "v7" in kind or "7x" in kind:
        # v7x: 2 TensorCores/chip, only 64 MiB physical VMEM -> cap limit at 44 MiB.
        return 6 << 20, 44 << 20, True
    if "v6" in kind or "trillium" in kind:
        # v6e: 1 TC, 128 MiB physical VMEM; bigger blocks amortize per-step overhead.
        return 5 << 20, 28 << 20, False
    # v5e / v5p / v4 / unknown: conservative, fits the 16 MiB scoped-VMEM default.
    return 2 << 20, None, False


def _pick_batch_block(B, T, D, itemsize, target_bytes, ensure_two_blocks):
    """Largest lane-dense batch chunk keeping each VMEM buffer ~<= target_bytes.

    The lane (last) block dim is always a multiple of 128 or the full B, so
    stores stay unmasked.  On multi-TensorCore chips (v7x) we additionally
    guarantee >= 2 grid blocks whenever B > 128 so both cores get work.
    """
    per_traj = max(1, T * D * itemsize)
    tb = max(128, (target_bytes // per_traj) // 128 * 128)   # 128-aligned chunk
    if ensure_two_blocks and B > 128:
        tb = min(tb, max(128, (pl.cdiv(B, 2) // 128) * 128))
    if tb >= B:
        return B        # single full-extent block (full-dim block is always legal)
    return tb           # multiple of 128


# ----------------------------------------------------------------------------
# Primary Pallas API: lane-dense (D, T, B) layout, zero relayout
# ----------------------------------------------------------------------------
def move_preprocess_lane_dense(traj_t, *, block_batch=None):
    """traj_t: (D, T, B) -> (centered_t (D, T, B), ref_t (D, 1, B))."""
    D, T, B = traj_t.shape
    itemsize = traj_t.dtype.itemsize
    target, vmem_limit, multi_tc = _chip_tuning()
    tb = block_batch or _pick_batch_block(B, T, D, itemsize, target, multi_tc)

    params = dict(dimension_semantics=("parallel",))
    if vmem_limit is not None:
        params["vmem_limit_bytes"] = vmem_limit

    centered_t = pl.pallas_call(
        _move_preprocess_kernel,
        out_shape=jax.ShapeDtypeStruct((D, T, B), traj_t.dtype),
        grid=(pl.cdiv(B, tb),),
        in_specs=[pl.BlockSpec((D, T, tb), lambda i: (0, 0, i))],
        out_specs=pl.BlockSpec((D, T, tb), lambda i: (0, 0, i)),
        compiler_params=pltpu.CompilerParams(**params),
        cost_estimate=pl.CostEstimate(
            flops=B * T * D,
            transcendentals=0,
            bytes_accessed=2 * B * T * D * itemsize),
    )(traj_t)
    ref_t = traj_t[:, T - 1:T, :]    # free XLA slice; no extra kernel output
    return centered_t, ref_t


def move_postprocess_lane_dense(pred_t, ref_t, *, block_batch=None):
    """pred_t: (D, T, B), ref_t: (D, 1, B) -> (D, T, B)."""
    D, T, B = pred_t.shape
    itemsize = pred_t.dtype.itemsize
    target, vmem_limit, multi_tc = _chip_tuning()
    tb = block_batch or _pick_batch_block(B, T, D, itemsize, target, multi_tc)

    params = dict(dimension_semantics=("parallel",))
    if vmem_limit is not None:
        params["vmem_limit_bytes"] = vmem_limit

    return pl.pallas_call(
        _move_postprocess_kernel,
        out_shape=jax.ShapeDtypeStruct((D, T, B), pred_t.dtype),
        grid=(pl.cdiv(B, tb),),
        in_specs=[
            pl.BlockSpec((D, T, tb), lambda i: (0, 0, i)),
            pl.BlockSpec((D, 1, tb), lambda i: (0, 0, i)),
        ],
        out_specs=pl.BlockSpec((D, T, tb), lambda i: (0, 0, i)),
        compiler_params=pltpu.CompilerParams(**params),
        cost_estimate=pl.CostEstimate(
            flops=B * T * D,
            transcendentals=0,
            bytes_accessed=(2 * B * T * D + B * D) * itemsize),
    )(pred_t, ref_t)


# ----------------------------------------------------------------------------
# (B, T, D) entry points used by the layer.
# Default: fused XLA broadcast sub/add (roofline-optimal when the model keeps
# the (B, T, D) layout and T*D is tiny).  Pallas path is opt-in and pays the
# relayout exactly once each way.
# ----------------------------------------------------------------------------
def move_preprocess(traj, *, block_batch=None, force_pallas=False):
    """traj: (B, T, D) -> (centered (B, T, D), ref_point (B, 1, D))."""
    use_pallas = force_pallas or (block_batch is not None)
    if not use_pallas:
        ref = traj[:, -1:, :]
        return traj - ref, ref                          # fused by XLA, zero extra HBM passes
    traj_t = jnp.transpose(traj, (2, 1, 0))             # single boundary relayout
    centered_t, ref_t = move_preprocess_lane_dense(traj_t, block_batch=block_batch)
    return jnp.transpose(centered_t, (2, 1, 0)), jnp.transpose(ref_t, (2, 1, 0))


def move_postprocess(pred, ref, *, block_batch=None, force_pallas=False):
    """pred: (B, T, D), ref: (B, 1, D) -> (B, T, D)."""
    use_pallas = force_pallas or (block_batch is not None)
    if not use_pallas:
        return pred + ref                               # fused by XLA
    pred_t = jnp.transpose(pred, (2, 1, 0))
    ref_t = jnp.transpose(ref, (2, 1, 0))
    out_t = move_postprocess_lane_dense(pred_t, ref_t, block_batch=block_batch)
    return jnp.transpose(out_t, (2, 1, 0))


# ----------------------------------------------------------------------------
# JAX-side module mirroring BaseProcessLayer's forward() dispatch semantics
# ----------------------------------------------------------------------------
class BaseProcessLayer:
    """JAX/Pallas port of model/process/__base.py::BaseProcessLayer.

    forward(inputs, preprocess, update_paras) reproduces the original routing:
      preprocess=True  -> (optional update_paras) -> self.preprocess(inputs)
      preprocess=False -> self.postprocess(inputs)
    Tensors flow dict-in / dict-out; untouched keys pass through.
    """

    def __init__(self, anntype: str,
                 preprocess_input_types: list[str],
                 postprocess_input_types: list[str]):
        self.anntype = anntype
        self.preprocess_input_types = preprocess_input_types
        self.postprocess_input_types = postprocess_input_types
        # TODO(synk): `Annotation(anntype)` picker is metadata-only (axis naming);
        # no tensor compute, so no Pallas equivalent is required.
        self.picker = anntype if anntype else None
        self._paras = {}   # filled by update_paras / preprocess (ref points)

    # -- abstract hooks in the PyTorch base; concrete "Move" semantics here --
    def update_paras(self, inputs):
        traj = inputs[self.preprocess_input_types[0]]
        self._paras['ref'] = traj[:, -1:, :]   # plain-JAX slice; no kernel launch

    def preprocess(self, inputs):
        key = self.preprocess_input_types[0]
        centered, ref = move_preprocess(inputs[key])
        self._paras['ref'] = ref
        outputs = dict(inputs)
        outputs[key] = centered
        outputs['ref_point'] = ref             # thread ref explicitly (avoid stale state)
        return outputs

    def postprocess(self, inputs):
        key = self.postprocess_input_types[0]
        pred = inputs[key]
        ref = inputs.get('ref_point', self._paras.get('ref'))
        if ref is None:
            raise ValueError(
                "postprocess needs 'ref_point' in inputs (or a prior "
                "preprocess/update_paras call on this layer).")
        if ref.shape[0] != pred.shape[0] or ref.shape[-1] != pred.shape[-1]:
            raise ValueError(
                f"ref_point shape {ref.shape} incompatible with predictions {pred.shape}")
        outputs = dict(inputs)
        outputs[key] = move_postprocess(pred, ref)
        return outputs

    # -- exact forward() dispatch semantics of the PyTorch module --
    def forward(self, inputs, preprocess: bool, update_paras=False,
                training=None, *args, **kwargs):
        if preprocess:
            if update_paras:
                self.update_paras(inputs)
            outputs = self.preprocess(inputs)
        else:
            outputs = self.postprocess(inputs)
        return outputs

    __call__ = forward


# ----------------------------------------------------------------------------
if __name__ == "__main__":
    key = jax.random.PRNGKey(0)
    B, T_OBS, T_PRED, D = 2, 8, 8, 2     # small trajectory-prediction shapes

    k1, k2, k3, k4 = jax.random.split(key, 4)
    obs = jax.random.normal(k1, (B, T_OBS, D), dtype=jnp.float32)

    layer = BaseProcessLayer(
        anntype='coordinate',
        preprocess_input_types=['obs'],
        postprocess_input_types=['pred'],
    )

    # --- module dispatch semantics at tiny shapes (fused-XLA fast path) -----
    pre_out = layer({'obs': obs}, preprocess=True, update_paras=True)
    centered = jax.block_until_ready(pre_out['obs'])
    ref = jax.block_until_ready(pre_out['ref_point'])

    pred_centered = jax.random.normal(k2, (B, T_PRED, D), dtype=jnp.float32)
    post_out = layer({'pred': pred_centered, 'ref_point': ref}, preprocess=False)
    pred_world = jax.block_until_ready(post_out['pred'])

    ref_exp = obs[:, -1:, :]
    assert jnp.allclose(ref, ref_exp, atol=1e-6)
    assert jnp.allclose(centered, obs - ref_exp, atol=1e-6)
    assert jnp.allclose(pred_world, pred_centered + ref_exp, atol=1e-6)

    # --- Pallas path 1: data already resident in lane-dense (D, T, B) layout,
    #     multi-block grid (128-lane chunks), no relayout anywhere ------------
    BB = 512
    big_t = jax.random.normal(k3, (D, T_OBS, BB), dtype=jnp.float32)
    cent_t, ref_t = move_preprocess_lane_dense(big_t, block_batch=128)       # grid=(4,)
    back_t = move_postprocess_lane_dense(cent_t, ref_t, block_batch=128)
    jax.block_until_ready(back_t)
    assert jnp.allclose(cent_t, big_t - big_t[:, -1:, :], atol=1e-6)
    assert jnp.allclose(back_t, big_t, atol=1e-5)

    # auto block-size path (generation-aware tiling) on the same data
    cent_auto, ref_auto = move_preprocess_lane_dense(big_t)
    jax.block_until_ready(cent_auto)
    assert jnp.allclose(cent_auto, cent_t, atol=1e-6)

    # --- Pallas path 2: (B, T, D) input forced through the kernel ------------
    #     (relayout paid once each way at the boundary)
    big = jax.random.normal(k4, (256, T_OBS, D), dtype=jnp.float32)
    cent_big, ref_big = move_preprocess(big, force_pallas=True, block_batch=128)
    back_big = move_postprocess(cent_big, ref_big, force_pallas=True, block_batch=128)
    jax.block_until_ready(back_big)
    assert jnp.allclose(cent_big, big - big[:, -1:, :], atol=1e-6)
    assert jnp.allclose(back_big, big, atol=1e-5)

    print("KERNEL_OK")
</pallas_src>

<mosaic_0001>
module attributes {stable_mosaic.version = 11 : i64} {
  func.func @_move_preprocess_kernel(%arg0: i32, %arg1: memref<2x8x128xf32, #tpu.memory_space<vmem>>, %arg2: memref<2x8x128xf32, #tpu.memory_space<vmem>>) attributes {dimension_semantics = [#tpu.dimension_semantics<parallel>], iteration_bounds = array<i64: 4>, scalar_prefetch = 0 : i64, scratch_operands = 0 : i64, tpu.core_type = #tpu.core_type<tc>, window_params = [{transform_indices = @transform_0, window_bounds = array<i64: 2, 8, 128>}, {transform_indices = @transform_1, window_bounds = array<i64: 2, 8, 128>}]} {
    %c0 = arith.constant 0 : index
    %c7 = arith.constant 7 : index
    %c0_0 = arith.constant 0 : index
    %0 = vector.load %arg1[%c0, %c7, %c0_0] : memref<2x8x128xf32, #tpu.memory_space<vmem>>, vector<2x1x128xf32>
    %c0_1 = arith.constant 0 : index
    %c0_2 = arith.constant 0 : index
    %c0_3 = arith.constant 0 : index
    %1 = vector.load %arg1[%c0_1, %c0_2, %c0_3] : memref<2x8x128xf32, #tpu.memory_space<vmem>>, vector<2x8x128xf32>
    %2 = vector.broadcast %0 : vector<2x1x128xf32> to vector<2x8x128xf32>
    %3 = arith.subf %1, %2 : vector<2x8x128xf32>
    %c0_4 = arith.constant 0 : index
    %c0_5 = arith.constant 0 : index
    %c0_6 = arith.constant 0 : index
    %4 = vector.load %arg2[%c0_4, %c0_5, %c0_6] : memref<2x8x128xf32, #tpu.memory_space<vmem>>, vector<2x8x128xf32>
    tpu.vector_store %arg2[%c0_4, %c0_5, %c0_6], %3 {strides = array<i32>} : memref<2x8x128xf32, #tpu.memory_space<vmem>>, vector<2x8x128xf32>,
    return
  }
  func.func @transform_0(%arg0: i32) -> (i32, i32, i32) {
    %c0_i32 = arith.constant 0 : i32
    %c0_i32_0 = arith.constant 0 : i32
    %c0_i32_1 = arith.constant 0 : i32
    return %c0_i32, %c0_i32_0, %arg0 : i32, i32, i32
  }
  func.func @transform_1(%arg0: i32) -> (i32, i32, i32) {
    %c0_i32 = arith.constant 0 : i32
    %c0_i32_0 = arith.constant 0 : i32
    %c0_i32_1 = arith.constant 0 : i32
    return %c0_i32, %c0_i32_0, %arg0 : i32, i32, i32
  }
}

</mosaic_0001>

<llo_original>
// kernel: tpu_custom_call.1
$region0: #{tpu_custom_call.1}
  #allocation0 [shape = 'u32[]', space=smem, size = 0x4, offset = 0x4, fixed_abs, tag = 'smem constant byte address 0x4 - core index']
  #allocation1 [shape = 'u32[144,128]{1,0:T(1,128)}', space=vmem, size = 0x12000, scoped, tag = 'internal scratch']
  %s0 = inlined_call_operand.hbm [shape: f32[2,8,512], index: 0, kind: input, shape index: {}]
  %s1 = inlined_call_operand.hbm [shape: f32[2,8,512], index: 1, kind: output, shape index: {}]
  %s2 = sld [smem:[#allocation0]]
  $region41: #{tpu_custom_call.1} parent=0
    _
  %s4 = ssub.s32 1, %s2
  %s5 = scalar_select 0, %s4, %s2
  $region1: #{tpu_custom_call.1} parent=0
    #allocation2 [shape = 'u8[16384]{0}', space=vmem, size = 0x4000, scoped, tag = 'input window, operand 0']
    #allocation3 [shape = 's32[2]{0}', space=sflag, size = 0x8, scoped, tag = 'scoped memory for tpu_custom_call.1']
    #allocation4 [shape = 's32[2]{0}', space=sflag, size = 0x8, scoped, tag = 'scoped memory for tpu_custom_call.1']
    #allocation5 [shape = 'u8[16384]{0}', space=vmem, size = 0x4000, scoped, tag = 'output window, operand 0']
    %6 = vsyncpa [#allocation3], 0
    %s7 = scalar_lea.sflag [#allocation3], 1
    %8 = vsyncpa %s7, 0
    %9 = vsyncpa [#allocation4], 0
    %s10 = scalar_lea.sflag [#allocation4], 1
    %11 = vsyncpa %s10, 0
    loop: start=0, step=1, limit=6
    $region2: #{tpu_custom_call.1} parent=1 // loop_pre_header
      _
    $region3: #{tpu_custom_call.1} parent=1 // loop_header
      %s13 = sphi 0, %s17
      %p14 = scmp.ge.s32.totalorder %s13, 6
      %s23 = sphi 0, %s25
      %s26 = sphi 0, %s23
      %s27 = sphi 0, %s26
      %s43 = sphi 0, %s27
      %s49 = sphi 0, %s51
      %s52 = sphi 0, %s49
      %s53 = sphi 0, %s52
      %s69 = sphi 0, %s53
    $region4: #{tpu_custom_call.1} parent=1 // loop_header_branch
      %16 = sbr.rel (%p14) target = $region8
    $region5: #{tpu_custom_call.1} parent=1 // loop_body
      %s18 = ssub.s32 %s13, 1
      %s19 = ssub.s32 %s13, 2
      %s20 = sadd.s32 %s13, 1
      %s21 = ssub.s32 %s13, %s20
      %p22 = scmp.eq.s32.totalorder %s21, 0
      %s24 = sadd.s32 %s23, 1
      %s25 = scalar_select %p22, %s23, %s24
      %p28 = pneg %p22
      %p29 = scmp.eq.s32.totalorder %s13, 3
      %p30 = por %p28, %p29
      %p31 = scmp.ne.s32.totalorder %s23, %s26
      %p32 = scmp.eq.s32.totalorder %s13, 0
      %p33 = por %p31, %p32
      %p34 = scmp.ne.s32.totalorder %s23, %s26
      %p35 = scmp.eq.s32.totalorder %s18, 3
      %p36 = por %p34, %p35
      %p37 = scmp.ne.s32.totalorder %s26, %s27
      %p38 = scmp.eq.s32.totalorder %s18, 0
      %p39 = por %p37, %p38
      %p40 = scmp.ne.s32.totalorder %s26, %s27
      %p41 = scmp.eq.s32.totalorder %s19, 3
      %p42 = por %p40, %p41
      %p44 = scmp.ne.s32.totalorder %s27, %s43
      %p45 = scmp.eq.s32.totalorder %s19, 0
      %p46 = por %p44, %p45
      %s47 = ssub.s32 %s13, %s20
      %p48 = scmp.eq.s32.totalorder %s47, 0
      %s50 = sadd.s32 %s49, 1
      %s51 = scalar_select %p48, %s49, %s50
      %p54 = pneg %p48
      %p55 = scmp.eq.s32.totalorder %s13, 3
      %p56 = por %p54, %p55
      %p57 = scmp.ne.s32.totalorder %s49, %s52
      %p58 = scmp.eq.s32.totalorder %s13, 0
      %p59 = por %p57, %p58
      %p60 = scmp.ne.s32.totalorder %s49, %s52
      %p61 = scmp.eq.s32.totalorder %s18, 3
      %p62 = por %p60, %p61
      %p63 = scmp.ne.s32.totalorder %s52, %s53
      %p64 = scmp.eq.s32.totalorder %s18, 0
      %p65 = por %p63, %p64
      %p66 = scmp.ne.s32.totalorder %s52, %s53
      %p67 = scmp.eq.s32.totalorder %s19, 3
      %p68 = por %p66, %p67
      %p70 = scmp.ne.s32.totalorder %s53, %s69
      %p71 = scmp.eq.s32.totalorder %s19, 0
      %p72 = por %p70, %p71
      %p73 = scmp.le.s32.totalorder 1, %s13
      %p74 = scmp.lt.s32.totalorder %s13, 5
      %p75 = pnand %p73, %p74
      %p76 = pneg %p75
      // Predicated region
      $region9: #{tpu_custom_call.1} parent=5 // pred_check
        _
      $region10: #{tpu_custom_call.1} parent=5 // pred_check_branch
        %78 = sbr.rel (%p75) target = $region12
      $region11: #{tpu_custom_call.1} parent=5 // pred_region
        %s79 = ssub.s32 %s13, 1
      $region12: #{tpu_custom_call.1} parent=5 // pred_fallthru
        _
      %p80 = scmp.lt.s32.totalorder %s13, 4
      // Predicated region
      $region13: #{tpu_custom_call.1} parent=5 // pred_check
        %p81 = pneg %p80
      $region14: #{tpu_custom_call.1} parent=5 // pred_check_branch
        %83 = sbr.rel (%p81) target = $region16
      $region15: #{tpu_custom_call.1} parent=5 // pred_region
        // Predicated region
        $region17: #{tpu_custom_call.1} parent=15 // pred_check
          %p84 = pneg %p33
        $region18: #{tpu_custom_call.1} parent=15 // pred_check_branch
          %86 = sbr.rel (%p84) target = $region20
        $region19: #{tpu_custom_call.1} parent=15 // pred_region
          %s87 = sand.u32 %s23, 1
          %s88 = scalar_lea.sflag [#allocation3], %s87
          %s89 = sand.u32 %s23, 1
          %s90 = smul.addr %s89, 16
          %s91 = scalar_lea.vmem [#allocation2], %s90
          %s93 = ssub.s32 256, 256
          %94 = vsyncadd %s88, %s93
          %s95 = smul.addr %s13, 128
          %s96 = scalar_lea.hbm %s0, %s95
          %s97 = sshll.u32 %s91, 4
          %s98 = int_to_ptr.vmem [resolvable:$true] %s97
          %103 = dma.hbm_to_vmem [thread:$0]  %s96, 256, %s98, %s88, 512, 128, 8
        $region20: #{tpu_custom_call.1} parent=15 // pred_fallthru
          _
      $region16: #{tpu_custom_call.1} parent=5 // pred_fallthru
        _
      %p104 = scmp.le.s32.totalorder 1, %s13
      %p105 = scmp.lt.s32.totalorder %s13, 5
      %p106 = pnand %p104, %p105
      %p107 = pneg %p106
      // Predicated region
      $region21: #{tpu_custom_call.1} parent=5 // pred_check
        _
      $region22: #{tpu_custom_call.1} parent=5 // pred_check_branch
        %109 = sbr.rel (%p106) target = $region24
      $region23: #{tpu_custom_call.1} parent=5 // pred_region
        %s110 = ssub.s32 %s13, 1
        %s111 = sand.u32 %s26, 1
        %s112 = scalar_lea.sflag [#allocation3], %s111
        %s113 = sand.u32 %s26, 1
        %s114 = smul.addr %s113, 16
        %s115 = scalar_lea.vmem [#allocation2], %s114
        // Predicated region
        $region25: #{tpu_custom_call.1} parent=23 // pred_check
          %p116 = pneg %p39
        $region26: #{tpu_custom_call.1} parent=23 // pred_check_branch
          %118 = sbr.rel (%p116) target = $region28
        $region27: #{tpu_custom_call.1} parent=23 // pred_region
          %119 = dma.done %s112, 256
        $region28: #{tpu_custom_call.1} parent=23 // pred_fallthru
          _
        %s120 = sand.u32 %s26, 1
        %s121 = scalar_lea.sflag [#allocation3], %s120
        %s122 = sand.u32 %s26, 1
        %s123 = smul.addr %s122, 16
        %s124 = scalar_lea.vmem [#allocation2], %s123
        %p125 = pneg %p39
        %p126 = pneg %p36
        %p127 = pneg %p65
        %p128 = pneg %p62
        %s129 = sand.u32 %s52, 1
        %s130 = scalar_lea.sflag [#allocation4], %s129
        %s131 = sand.u32 %s52, 1
        %s132 = smul.addr %s131, 16
        %s133 = scalar_lea.vmem [#allocation5], %s132
        %v134 = vld [vmem:[%s115 + $0x7] sm:$0x1]
        %v135 = vld [vmem:[%s115 + $0xf] sm:$0x1]
        %v136 = vld [vmem:[%s115] sm:$0xff]
        %v137 = vld [vmem:[%s115 + $0x8] sm:$0xff]
        %v138 = vlaneseq
        %v139 = vshrl.u32 %v138, 7
        %v140 = vsub.s32 0, %v139
        %v141 = vrot.slane %v134, %v140
        %v142 = vlaneseq
        %v143 = vshrl.u32 %v142, 7
        %v144 = vsub.s32 0, %v143
        %v145 = vrot.slane %v135, %v144
        %v146 = vsub.f32 %v136, %v141
        %v147 = vsub.f32 %v137, %v145
        %148 = vst [vmem:[%s133] sm:$0xff] %v146
        %149 = vst [vmem:[%s133 + $0x8] sm:$0xff] %v147
        %s150 = sand.u32 %s52, 1
        %s151 = scalar_lea.sflag [#allocation4], %s150
        %s152 = sand.u32 %s52, 1
        %s153 = smul.addr %s152, 16
        %s154 = scalar_lea.vmem [#allocation5], %s153
        // Predicated region
        $region29: #{tpu_custom_call.1} parent=23 // pred_check
          %p155 = pneg %p62
        $region30: #{tpu_custom_call.1} parent=23 // pred_check_branch
          %157 = sbr.rel (%p155) target = $region32
        $region31: #{tpu_custom_call.1} parent=23 // pred_region
          %s159 = ssub.s32 256, 256
          %160 = vsyncadd %s151, %s159
          %s161 = smul.addr %s18, 128
          %s162 = scalar_lea.hbm %s1, %s161
          %s163 = sshll.u32 %s154, 4
          %s164 = int_to_ptr.vmem [resolvable:$true] %s163
          %169 = dma.vmem_to_hbm [thread:$0]  %s164, 256, %s162, %s151, 128, 512, 8
        $region32: #{tpu_custom_call.1} parent=23 // pred_fallthru
          _
      $region24: #{tpu_custom_call.1} parent=5 // pred_fallthru
        _
      %p170 = scmp.le.s32.totalorder 2, %s13
      // Predicated region
      $region33: #{tpu_custom_call.1} parent=5 // pred_check
        %p171 = pneg %p170
      $region34: #{tpu_custom_call.1} parent=5 // pred_check_branch
        %173 = sbr.rel (%p171) target = $region36
      $region35: #{tpu_custom_call.1} parent=5 // pred_region
        %s174 = ssub.s32 %s13, 2
        // Predicated region
        $region37: #{tpu_custom_call.1} parent=35 // pred_check
          %p175 = pneg %p68
        $region38: #{tpu_custom_call.1} parent=35 // pred_check_branch
          %177 = sbr.rel (%p175) target = $region40
        $region39: #{tpu_custom_call.1} parent=35 // pred_region
          %s178 = sand.u32 %s53, 1
          %s179 = scalar_lea.sflag [#allocation4], %s178
          %s180 = sand.u32 %s53, 1
          %s181 = smul.addr %s180, 16
          %s182 = scalar_lea.vmem [#allocation5], %s181
          %183 = dma.done %s179, 256
        $region40: #{tpu_custom_call.1} parent=35 // pred_fallthru
          _
      $region36: #{tpu_custom_call.1} parent=5 // pred_fallthru
        _
    $region6: #{tpu_custom_call.1} parent=1 // loop_footer
      %s17 = sadd.s32 1, %s13
    $region7: #{tpu_custom_call.1} parent=1 // loop_footer_branch
      %12 = sbr.rel target = $region3
    $region8: #{tpu_custom_call.1} parent=1 // loop_exit
      _
    %184 = vsyncpa [#allocation3], 1
    %s185 = scalar_lea.sflag [#allocation3], 1
    %186 = vsyncpa %s185, 1
    %187 = vsyncpa [#allocation4], 1
    %s188 = scalar_lea.sflag [#allocation4], 1
    %189 = vsyncpa %s188, 1

</llo_original>
